<compile_context>
chip_gen: v5e
topology: v5e:2x2
jax: 0.10.0
libtpu: 0.0.40
codegen_flags: <defaults>
</compile_context>

<pallas_src>
import math
import functools

import numpy as np
import jax
import jax.numpy as jnp
from jax.experimental import pallas as pl
from jax.experimental.pallas import tpu as pltpu


def _sample_attention_kernel(x_ref, w_ref, b_ref, mask_ref, out_ref, *,
                             B, S, F, d_attn, num_heads, d_k):
    Hd = num_heads * d_k                      # == d_attn
    BS = B * S

    # Flatten to 2-D so the projection chain is one contiguous MXU tile.
    x = x_ref[...].reshape(BS, F)             # (BS, F)

    # Static, sublane-aligned slices of the fused parameter slabs.
    w1 = w_ref[0:F, :]                        # (F, 3*d_attn)      fused Wk|Wq|Wv
    w2 = w_ref[F:F + 3 * d_attn, :]           # (3*d_attn, 3*Hd)   block-diag head proj
    b1 = b_ref[0:1, :]                        # (1, 3*d_attn)
    b2 = b_ref[1:2, :]                        # (1, 3*Hd)          Q part pre-scaled
    wof = b_ref[2:3, 0:Hd].reshape(1, 1, Hd)  # folded Wout(perm) @ Wfc

    # ---- Stage 1: fused K|Q|V FC_ELU (one matmul instead of three) ----------
    z = jnp.dot(x, w1, preferred_element_type=jnp.float32) + b1
    # ELU(alpha=1).
    # TODO(synk): switch to jnp.expm1 once its Mosaic lowering is confirmed.
    kqv = jnp.where(z > 0.0, z, jnp.exp(z) - 1.0)                   # (BS, 3*d_attn)

    # ---- Stage 2: fused per-head projections (block-diagonal weight) --------
    heads = jnp.dot(kqv, w2, preferred_element_type=jnp.float32) + b2   # (BS, 3*Hd)

    kh = heads[:, 0 * Hd:1 * Hd].reshape(B, S, Hd)
    qh = heads[:, 1 * Hd:2 * Hd].reshape(B, S, Hd)                  # scale already folded in
    vh = heads[:, 2 * Hd:3 * Hd].reshape(B, S, Hd)

    # ---- All heads at once via head-block-diagonal expansion ----------------
    # mask[n, m] = 1 iff head(n) == head(m), with rows n = h*S + k and
    # columns m = h*d_k + j (precomputed offline, passed as an operand).
    mask = mask_ref[...]                                            # (H*S, Hd)

    def expand(a):                                                  # (B,S,Hd) -> (B,H*S,Hd)
        return jnp.concatenate([a] * num_heads, axis=1) * mask[None, :, :]

    k_exp = expand(kh)
    v_exp = expand(vh)

    # scores[b, q, h*S + k] = <qh[b,q,head h], kh[b,k,head h]>   (scale folded into W2/b2)
    scores = jnp.einsum('bqm,bnm->bqn', qh, k_exp,
                        preferred_element_type=jnp.float32)         # (B, S, H*S)

    # PyTorch F.softmax(scaled) w/o dim on a 3-D tensor -> softmax over axis 0 (batch).
    m0 = jnp.max(scores, axis=0, keepdims=True)
    e0 = jnp.exp(scores - m0)
    attn = e0 / jnp.sum(e0, axis=0, keepdims=True)                  # (B, S, H*S)

    # head_out[b, q, h*d_k + j] = sum_k attn[b,q,h*S+k] * vh[b,k,h*d_k+j]
    head_out = jnp.einsum('bqn,bnm->bqm', attn, v_exp,
                          preferred_element_type=jnp.float32)       # (B, S, Hd) head-major

    # Out-projection + final fc folded into one Hd-vector (softmax-invariant bias dropped).
    logits = jnp.sum(head_out * wof, axis=2, keepdims=True)[:, :, 0]   # (B, S)

    # Final softmax over dim=1 (the clone/sequence axis).
    m1 = jnp.max(logits, axis=1, keepdims=True)
    e1 = jnp.exp(logits - m1)
    out_ref[...] = (e1 / jnp.sum(e1, axis=1, keepdims=True)).reshape(1, B, S)


def sample_attention_pallas(x, kp, num_heads):
    """x: (B, S, F) for one call, or (N, B, S, F) for N independent stacked calls."""
    squeeze = x.ndim == 3
    if squeeze:
        x = x[None]
    N, B, S, F = x.shape

    w_slab = kp['w']
    b_slab = kp['b']
    d_attn = w_slab.shape[1] // 3
    d_k = d_attn // num_heads

    # Head-block-diagonal expansion mask (compile-time constant data).
    mask = jnp.asarray(np.kron(np.eye(num_heads, dtype=np.float32),
                               np.ones((S, d_k), dtype=np.float32)))   # (H*S, H*d_k)

    kernel = functools.partial(
        _sample_attention_kernel,
        B=B, S=S, F=F, d_attn=d_attn, num_heads=num_heads, d_k=d_k)

    out = pl.pallas_call(
        kernel,
        out_shape=jax.ShapeDtypeStruct((N, B, S), jnp.float32),
        grid=(N,),
        in_specs=[
            pl.BlockSpec((1, B, S, F), lambda n: (n, 0, 0, 0)),
            pl.BlockSpec(w_slab.shape, lambda n: (0, 0)),
            pl.BlockSpec(b_slab.shape, lambda n: (0, 0)),
            pl.BlockSpec(mask.shape, lambda n: (0, 0)),
        ],
        out_specs=pl.BlockSpec((1, B, S), lambda n: (n, 0, 0)),
        compiler_params=pltpu.CompilerParams(
            dimension_semantics=("parallel",)),   # shard independent calls (2 TCs on v7x)
    )(x, w_slab, b_slab, mask)
    return out[0] if squeeze else out


# ----------------------------- parameter setup ------------------------------

def init_raw_params(key, f_mapped, d_attn, num_heads):
    """PyTorch-convention (out_features, in_features) weights, deterministic."""
    d_k = d_attn // num_heads
    keys = iter(jax.random.split(key, 24))

    def w(shape, scale=0.1):
        return jax.random.normal(next(keys), shape, jnp.float32) * scale

    raw = dict(
        Wk=w((d_attn, f_mapped)), bk=w((d_attn,)),
        Wq=w((d_attn, f_mapped)), bq=w((d_attn,)),
        Wv=w((d_attn, f_mapped)), bv=w((d_attn,)),
        WK=w((num_heads, d_k, d_attn)), bK=w((num_heads, d_k)),
        WQ=w((num_heads, d_k, d_attn)), bQ=w((num_heads, d_k)),
        WV=w((num_heads, d_k, d_attn)), bV=w((num_heads, d_k)),
        Wout=w((d_attn, d_attn)), bout=w((d_attn,)),
        Wfc=w((1, d_attn)), bfc=w((1,)),
    )
    return raw


def pack_kernel_params(raw, num_heads):
    """Offline fusion/packing of all Linear layers into 2 slabs (free at runtime)."""
    d_attn = raw['Wout'].shape[0]
    d_k = d_attn // num_heads
    Hd = num_heads * d_k
    assert Hd == d_attn
    scale = 1.0 / math.sqrt(d_k)

    # Stage 1: fused [Wk | Wq | Wv] -> (F, 3*d_attn), biases -> (3*d_attn,)
    w1 = jnp.concatenate([raw['Wk'].T, raw['Wq'].T, raw['Wv'].T], axis=1)
    b1 = jnp.concatenate([raw['bk'], raw['bq'], raw['bv']], axis=0)

    def head_mat(W):
        # (H, d_k, d_attn) torch (out,in) -> (d_attn, H*d_k); head h at cols [h*d_k:(h+1)*d_k]
        return jnp.transpose(W, (2, 0, 1)).reshape(d_attn, Hd)

    whk = head_mat(raw['WK'])
    whq = head_mat(raw['WQ']) * scale          # fold 1/sqrt(d_k) into the Q path
    whv = head_mat(raw['WV'])
    bhk = raw['bK'].reshape(Hd)
    bhq = raw['bQ'].reshape(Hd) * scale
    bhv = raw['bV'].reshape(Hd)

    # Stage 2: block-diagonal (3*d_attn, 3*Hd) so the K/Q/V head projections fuse
    # into ONE matmul on the packed [K|Q|V] activations.
    w2 = jnp.zeros((3 * d_attn, 3 * Hd), jnp.float32)
    w2 = w2.at[0 * d_attn:1 * d_attn, 0 * Hd:1 * Hd].set(whk)
    w2 = w2.at[1 * d_attn:2 * d_attn, 1 * Hd:2 * Hd].set(whq)
    w2 = w2.at[2 * d_attn:3 * d_attn, 2 * Hd:3 * Hd].set(whv)
    b2 = jnp.concatenate([bhk, bhq, bhv], axis=0)

    # Out-projection + final fc folded into one vector.
    # torch concat feature index = j*H + h; kernel produces head-major h*d_k + j,
    # so permute the (transposed) Wout rows, then multiply by Wfc^T.
    perm = np.array([j * num_heads + h for h in range(num_heads) for j in range(d_k)])
    wo_perm = raw['Wout'].T[perm, :]                      # (Hd, d_attn)
    wof = (wo_perm @ raw['Wfc'].T)[:, 0]                  # (Hd,)
    # bout @ Wfc^T + bfc is the same scalar at every position -> softmax-invariant, dropped.

    w_slab = jnp.concatenate([w1, w2], axis=0)            # (F + 3*d_attn, 3*d_attn)
    wof_row = jnp.zeros((3 * d_attn,), jnp.float32).at[:Hd].set(wof)
    b_slab = jnp.stack([b1, b2, wof_row], axis=0)         # (3, 3*d_attn)
    return dict(w=w_slab, b=b_slab)


# ----------------------------- pure-JAX reference ---------------------------

def sample_attention_ref(x, raw, num_heads):
    B, S, _ = x.shape
    d_k = raw['Wout'].shape[0] // num_heads

    def lin(z, W, b):
        return z @ W.T + b

    def elu(z):
        return jnp.where(z > 0, z, jnp.exp(z) - 1.0)

    K = elu(lin(x, raw['Wk'], raw['bk']))
    Q = elu(lin(x, raw['Wq'], raw['bq']))
    V = elu(lin(x, raw['Wv'], raw['bv']))

    heads = []
    for h in range(num_heads):
        key = lin(K, raw['WK'][h], raw['bK'][h])
        query = lin(Q, raw['WQ'][h], raw['bQ'][h])
        value = lin(V, raw['WV'][h], raw['bV'][h])
        y = jnp.matmul(query, jnp.swapaxes(key, 1, 2)) / math.sqrt(d_k)
        attn = jax.nn.softmax(y, axis=0)                  # implicit dim=0 for 3-D input
        heads.append(jnp.matmul(attn, value))
    concat = jnp.stack(heads, axis=3).reshape(B, S, -1)
    out = lin(concat, raw['Wout'], raw['bout'])
    logits = lin(out, raw['Wfc'], raw['bfc'])[..., 0]
    return jax.nn.softmax(logits, axis=1)


# ---------------------------------- main -------------------------------------

if __name__ == "__main__":
    B, S = 2, 8                  # batch, clone/sequence
    f_mapped = 16
    d_attn = 32
    num_heads = 4
    N = 4                        # independent forward calls batched through one pallas_call

    key = jax.random.PRNGKey(0)
    kx, kp = jax.random.split(key)
    x = jax.random.normal(kx, (N, B, S, f_mapped), jnp.float32)

    raw = init_raw_params(kp, f_mapped, d_attn, num_heads)
    kparams = pack_kernel_params(raw, num_heads)

    # Batched path (grid over independent calls).
    out = jax.block_until_ready(sample_attention_pallas(x, kparams, num_heads))
    assert out.shape == (N, B, S)

    ref = jnp.stack([sample_attention_ref(x[n], raw, num_heads) for n in range(N)])
    assert bool(jnp.allclose(out, ref, atol=1e-5, rtol=1e-5)), "mismatch vs reference (batched)"

    # Single-call path (B, S, F), same semantics as the PyTorch forward.
    out1 = jax.block_until_ready(sample_attention_pallas(x[0], kparams, num_heads))
    assert out1.shape == (B, S)
    assert bool(jnp.allclose(out1, ref[0], atol=1e-5, rtol=1e-5)), "mismatch vs reference (single)"

    print("KERNEL_OK")
</pallas_src>

<mosaic_0001>
module attributes {stable_mosaic.version = 11 : i64} {
  func.func @_sample_attention_kernel(%arg0: i32, %arg1: memref<1x2x8x16xf32, #tpu.memory_space<vmem>>, %arg2: memref<112x96xf32, #tpu.memory_space<vmem>>, %arg3: memref<3x96xf32, #tpu.memory_space<vmem>>, %arg4: memref<32x32xf32, #tpu.memory_space<vmem>>, %arg5: memref<1x2x8xf32, #tpu.memory_space<vmem>>) attributes {dimension_semantics = [#tpu.dimension_semantics<parallel>], iteration_bounds = array<i64: 4>, scalar_prefetch = 0 : i64, scratch_operands = 0 : i64, tpu.core_type = #tpu.core_type<tc>, window_params = [{transform_indices = @transform_0, window_bounds = array<i64: 1, 2, 8, 16>}, {pipeline_mode = #tpu.pipeline_mode<synchronous>, transform_indices = @transform_1, window_bounds = array<i64: 112, 96>}, {pipeline_mode = #tpu.pipeline_mode<synchronous>, transform_indices = @transform_2, window_bounds = array<i64: 3, 96>}, {pipeline_mode = #tpu.pipeline_mode<synchronous>, transform_indices = @transform_3, window_bounds = array<i64: 32, 32>}, {transform_indices = @transform_4, window_bounds = array<i64: 1, 2, 8>}]} {
    %c0 = arith.constant 0 : index
    %c0_0 = arith.constant 0 : index
    %c0_1 = arith.constant 0 : index
    %c0_2 = arith.constant 0 : index
    %0 = vector.load %arg1[%c0, %c0_0, %c0_1, %c0_2] : memref<1x2x8x16xf32, #tpu.memory_space<vmem>>, vector<1x2x8x16xf32>
    %1 = vector.shape_cast %0 : vector<1x2x8x16xf32> to vector<16x16xf32>
    %c0_3 = arith.constant 0 : index
    %c0_4 = arith.constant 0 : index
    %2 = vector.load %arg2[%c0_3, %c0_4] : memref<112x96xf32, #tpu.memory_space<vmem>>, vector<16x96xf32>
    %c16 = arith.constant 16 : index
    %c0_5 = arith.constant 0 : index
    %3 = vector.load %arg2[%c16, %c0_5] : memref<112x96xf32, #tpu.memory_space<vmem>>, vector<96x96xf32>
    %c0_6 = arith.constant 0 : index
    %c0_7 = arith.constant 0 : index
    %4 = vector.load %arg3[%c0_6, %c0_7] : memref<3x96xf32, #tpu.memory_space<vmem>>, vector<1x96xf32>
    %c1 = arith.constant 1 : index
    %c0_8 = arith.constant 0 : index
    %5 = vector.load %arg3[%c1, %c0_8] : memref<3x96xf32, #tpu.memory_space<vmem>>, vector<1x96xf32>
    %c2 = arith.constant 2 : index
    %c0_9 = arith.constant 0 : index
    %6 = vector.load %arg3[%c2, %c0_9] : memref<3x96xf32, #tpu.memory_space<vmem>>, vector<1x32xf32>
    %7 = vector.shape_cast %6 : vector<1x32xf32> to vector<1x1x32xf32>
    %cst = arith.constant dense<0.000000e+00> : vector<16x96xf32>
    %8 = tpu.matmul %1, %2, %cst {dimension_numbers = #tpu.dot_dimension_numbers<[1], [0], [0], [1], [0, 0, 1, 1], [], []>} : vector<16x16xf32>, vector<16x96xf32>, vector<16x96xf32> -> vector<16x96xf32>
    %9 = vector.broadcast %4 : vector<1x96xf32> to vector<16x96xf32>
    %10 = arith.addf %8, %9 : vector<16x96xf32>
    %cst_10 = arith.constant 0.000000e+00 : f32
    %11 = vector.broadcast %cst_10 : f32 to vector<16x96xf32>
    %12 = arith.cmpf ogt, %10, %11 : vector<16x96xf32>
    %13 = math.exp %10 : vector<16x96xf32>
    %cst_11 = arith.constant 1.000000e+00 : f32
    %14 = vector.broadcast %cst_11 : f32 to vector<16x96xf32>
    %15 = arith.subf %13, %14 : vector<16x96xf32>
    %16 = arith.select %12, %10, %15 : vector<16x96xi1>, vector<16x96xf32>
    %cst_12 = arith.constant dense<0.000000e+00> : vector<16x96xf32>
    %17 = tpu.matmul %16, %3, %cst_12 {dimension_numbers = #tpu.dot_dimension_numbers<[1], [0], [0], [1], [0, 0, 1, 1], [], []>} : vector<16x96xf32>, vector<96x96xf32>, vector<16x96xf32> -> vector<16x96xf32>
    %18 = vector.broadcast %5 : vector<1x96xf32> to vector<16x96xf32>
    %19 = arith.addf %17, %18 : vector<16x96xf32>
    %20 = vector.extract_strided_slice %19 {offsets = [0, 0], sizes = [16, 32], strides = [1, 1]} : vector<16x96xf32> to vector<16x32xf32>
    %21 = vector.shape_cast %20 : vector<16x32xf32> to vector<2x8x32xf32>
    %22 = vector.extract_strided_slice %19 {offsets = [0, 32], sizes = [16, 32], strides = [1, 1]} : vector<16x96xf32> to vector<16x32xf32>
    %23 = vector.shape_cast %22 : vector<16x32xf32> to vector<2x8x32xf32>
    %24 = vector.extract_strided_slice %19 {offsets = [0, 64], sizes = [16, 32], strides = [1, 1]} : vector<16x96xf32> to vector<16x32xf32>
    %25 = vector.shape_cast %24 : vector<16x32xf32> to vector<2x8x32xf32>
    %c0_13 = arith.constant 0 : index
    %c0_14 = arith.constant 0 : index
    %26 = vector.load %arg4[%c0_13, %c0_14] : memref<32x32xf32, #tpu.memory_space<vmem>>, vector<32x32xf32>
    %27 = tpu.concatenate %21, %21, %21, %21 in 1 : vector<2x8x32xf32>, vector<2x8x32xf32>, vector<2x8x32xf32>, vector<2x8x32xf32> -> vector<2x32x32xf32>
    %28 = vector.shape_cast %26 : vector<32x32xf32> to vector<1x32x32xf32>
    %29 = vector.broadcast %28 : vector<1x32x32xf32> to vector<2x32x32xf32>
    %30 = arith.mulf %27, %29 : vector<2x32x32xf32>
    %31 = tpu.concatenate %25, %25, %25, %25 in 1 : vector<2x8x32xf32>, vector<2x8x32xf32>, vector<2x8x32xf32>, vector<2x8x32xf32> -> vector<2x32x32xf32>
    %32 = vector.shape_cast %26 : vector<32x32xf32> to vector<1x32x32xf32>
    %33 = vector.broadcast %32 : vector<1x32x32xf32> to vector<2x32x32xf32>
    %34 = arith.mulf %31, %33 : vector<2x32x32xf32>
    "tpu.trace_start"() <{level = 10 : i32, message = "bqm,bnm->bqn"}> : () -> ()
    %cst_15 = arith.constant dense<0.000000e+00> : vector<2x8x32xf32>
    %35 = tpu.matmul %23, %30, %cst_15 {dimension_numbers = #tpu.dot_dimension_numbers<[2], [2], [1], [1], [0, 0, 0, 1, 1, 1], [0], [0]>} : vector<2x8x32xf32>, vector<2x32x32xf32>, vector<2x8x32xf32> -> vector<2x8x32xf32>
    "tpu.trace_stop"() : () -> ()
    %cst_16 = arith.constant dense<0xFF800000> : vector<8x32xf32>
    %36 = vector.multi_reduction <maximumf>, %35, %cst_16 [0] : vector<2x8x32xf32> to vector<8x32xf32>
    %37 = vector.shape_cast %36 : vector<8x32xf32> to vector<1x8x32xf32>
    %38 = vector.broadcast %37 : vector<1x8x32xf32> to vector<2x8x32xf32>
    %39 = arith.subf %35, %38 : vector<2x8x32xf32>
    %40 = math.exp %39 : vector<2x8x32xf32>
    %cst_17 = arith.constant dense<0.000000e+00> : vector<8x32xf32>
    %41 = vector.multi_reduction <add>, %40, %cst_17 [0] : vector<2x8x32xf32> to vector<8x32xf32>
    %42 = vector.shape_cast %41 : vector<8x32xf32> to vector<1x8x32xf32>
    %43 = vector.broadcast %42 : vector<1x8x32xf32> to vector<2x8x32xf32>
    %44 = arith.divf %40, %43 : vector<2x8x32xf32>
    "tpu.trace_start"() <{level = 10 : i32, message = "bqn,bnm->bqm"}> : () -> ()
    %cst_18 = arith.constant dense<0.000000e+00> : vector<2x8x32xf32>
    %45 = tpu.matmul %44, %34, %cst_18 {dimension_numbers = #tpu.dot_dimension_numbers<[2], [1], [1], [2], [0, 0, 0, 1, 1, 2], [0], [0]>} : vector<2x8x32xf32>, vector<2x32x32xf32>, vector<2x8x32xf32> -> vector<2x8x32xf32>
    "tpu.trace_stop"() : () -> ()
    %46 = vector.broadcast %7 : vector<1x1x32xf32> to vector<2x8x32xf32>
    %47 = arith.mulf %45, %46 : vector<2x8x32xf32>
    %cst_19 = arith.constant dense<0.000000e+00> : vector<2x8xf32>
    %48 = vector.multi_reduction <add>, %47, %cst_19 [2] : vector<2x8x32xf32> to vector<2x8xf32>
    %49 = vector.shape_cast %48 : vector<2x8xf32> to vector<2x8x1xf32>
    %50 = vector.shape_cast %49 : vector<2x8x1xf32> to vector<2x8xf32>
    %cst_20 = arith.constant dense<0xFF800000> : vector<2xf32>
    %51 = vector.multi_reduction <maximumf>, %50, %cst_20 [1] : vector<2x8xf32> to vector<2xf32>
    %52 = vector.shape_cast %51 : vector<2xf32> to vector<2x1xf32>
    %53 = vector.broadcast %52 : vector<2x1xf32> to vector<2x8xf32>
    %54 = arith.subf %50, %53 : vector<2x8xf32>
    %55 = math.exp %54 : vector<2x8xf32>
    %cst_21 = arith.constant dense<0.000000e+00> : vector<2xf32>
    %56 = vector.multi_reduction <add>, %55, %cst_21 [1] : vector<2x8xf32> to vector<2xf32>
    %57 = vector.shape_cast %56 : vector<2xf32> to vector<2x1xf32>
    %58 = vector.broadcast %57 : vector<2x1xf32> to vector<2x8xf32>
    %59 = arith.divf %55, %58 : vector<2x8xf32>
    %60 = vector.shape_cast %59 : vector<2x8xf32> to vector<1x2x8xf32>
    %c0_22 = arith.constant 0 : index
    %c0_23 = arith.constant 0 : index
    %c0_24 = arith.constant 0 : index
    %61 = vector.load %arg5[%c0_22, %c0_23, %c0_24] : memref<1x2x8xf32, #tpu.memory_space<vmem>>, vector<1x2x8xf32>
    tpu.vector_store %arg5[%c0_22, %c0_23, %c0_24], %60 {strides = array<i32>} : memref<1x2x8xf32, #tpu.memory_space<vmem>>, vector<1x2x8xf32>,
    return
  }
  func.func @transform_0(%arg0: i32) -> (i32, i32, i32, i32) {
    %c0_i32 = arith.constant 0 : i32
    %c0_i32_0 = arith.constant 0 : i32
    %c0_i32_1 = arith.constant 0 : i32
    %c0_i32_2 = arith.constant 0 : i32
    return %arg0, %c0_i32, %c0_i32_0, %c0_i32_1 : i32, i32, i32, i32
  }
  func.func @transform_1(%arg0: i32) -> (i32, i32) {
    %c0_i32 = arith.constant 0 : i32
    %c0_i32_0 = arith.constant 0 : i32
    %c0_i32_1 = arith.constant 0 : i32
    return %c0_i32, %c0_i32_0 : i32, i32
  }
  func.func @transform_2(%arg0: i32) -> (i32, i32) {
    %c0_i32 = arith.constant 0 : i32
    %c0_i32_0 = arith.constant 0 : i32
    %c0_i32_1 = arith.constant 0 : i32
    return %c0_i32, %c0_i32_0 : i32, i32
  }
  func.func @transform_3(%arg0: i32) -> (i32, i32) {
    %c0_i32 = arith.constant 0 : i32
    %c0_i32_0 = arith.constant 0 : i32
    %c0_i32_1 = arith.constant 0 : i32
    return %c0_i32, %c0_i32_0 : i32, i32
  }
  func.func @transform_4(%arg0: i32) -> (i32, i32, i32) {
    %c0_i32 = arith.constant 0 : i32
    %c0_i32_0 = arith.constant 0 : i32
    %c0_i32_1 = arith.constant 0 : i32
    return %arg0, %c0_i32, %c0_i32_0 : i32, i32, i32
  }
}

</mosaic_0001>

<llo_original>
// kernel: tpu_custom_call.1
$region0: #{tpu_custom_call.1}
  #allocation0 [shape = 'u32[]', space=smem, size = 0x4, offset = 0x4, fixed_abs, tag = 'smem constant byte address 0x4 - core index']
  #allocation1 [shape = 'u32[72,128]{1,0:T(1,128)}', space=vmem, size = 0x9000, scoped, tag = 'internal scratch']
  %s0 = inlined_call_operand.vmem [shape: f32[4,2,8,16], index: 0, kind: input, shape index: {}]
  %s1 = inlined_call_operand.vmem [shape: f32[112,96], index: 1, kind: input, shape index: {}]
  %s2 = inlined_call_operand.vmem [shape: f32[3,96], index: 2, kind: input, shape index: {}]
  %s3 = inlined_call_operand.vmem [shape: f32[32,32], index: 3, kind: input, shape index: {}]
  %s4 = inlined_call_operand.hbm [shape: f32[4,2,8], index: 4, kind: output, shape index: {}]
  %s5 = sld [smem:[#allocation0]]
  $region49: #{tpu_custom_call.1} parent=0
    _
  %s7 = ssub.s32 1, %s5
  %s8 = scalar_select 0, %s7, %s5
  $region1: #{tpu_custom_call.1} parent=0
    #allocation2 [shape = 'u8[2048]{0}', space=vmem, size = 0x800, scoped, tag = 'output window, operand 0']
    #allocation3 [shape = 's32[2]{0}', space=sflag, size = 0x8, scoped, tag = 'scoped memory for tpu_custom_call.1']
    %9 = vsyncpa [#allocation3], 0
    %s10 = scalar_lea.sflag [#allocation3], 1
    %11 = vsyncpa %s10, 0
    loop: start=0, step=1, limit=6
    $region2: #{tpu_custom_call.1} parent=1 // loop_pre_header
      _
    $region3: #{tpu_custom_call.1} parent=1 // loop_header
      %s13 = sphi 0, %s17
      %p14 = scmp.ge.s32.totalorder %s13, 6
      %s23 = sphi 0, %s25
      %s26 = sphi 0, %s23
      %s27 = sphi 0, %s26
      %s43 = sphi 0, %s27
      %s47 = sphi 0, %s47
      %s49 = sphi 0, %s47
      %s50 = sphi 0, %s49
      %s64 = sphi 0, %s50
      %s68 = sphi 0, %s68
      %s70 = sphi 0, %s68
      %s71 = sphi 0, %s70
      %s85 = sphi 0, %s71
      %s89 = sphi 0, %s89
      %s91 = sphi 0, %s89
      %s92 = sphi 0, %s91
      %s106 = sphi 0, %s92
      %s112 = sphi 0, %s114
      %s115 = sphi 0, %s112
      %s116 = sphi 0, %s115
      %s132 = sphi 0, %s116
    $region4: #{tpu_custom_call.1} parent=1 // loop_header_branch
      %16 = sbr.rel (%p14) target = $region8
    $region5: #{tpu_custom_call.1} parent=1 // loop_body
      %s18 = ssub.s32 %s13, 1
      %s19 = ssub.s32 %s13, 2
      %s20 = sadd.s32 %s13, 1
      %s21 = ssub.s32 %s13, %s20
      %p22 = scmp.eq.s32.totalorder %s21, 0
      %s24 = sadd.s32 %s23, 1
      %s25 = scalar_select %p22, %s23, %s24
      %p28 = pneg %p22
      %p29 = scmp.eq.s32.totalorder %s13, 3
      %p30 = por %p28, %p29
      %p31 = scmp.ne.s32.totalorder %s23, %s26
      %p32 = scmp.eq.s32.totalorder %s13, 0
      %p33 = por %p31, %p32
      %p34 = scmp.ne.s32.totalorder %s23, %s26
      %p35 = scmp.eq.s32.totalorder %s18, 3
      %p36 = por %p34, %p35
      %p37 = scmp.ne.s32.totalorder %s26, %s27
      %p38 = scmp.eq.s32.totalorder %s18, 0
      %p39 = por %p37, %p38
      %p40 = scmp.ne.s32.totalorder %s26, %s27
      %p41 = scmp.eq.s32.totalorder %s19, 3
      %p42 = por %p40, %p41
      %p44 = scmp.ne.s32.totalorder %s27, %s43
      %p45 = scmp.eq.s32.totalorder %s19, 0
      %p46 = por %p44, %p45
      %s48 = sadd.s32 %s47, 1
      %p51 = scmp.eq.s32.totalorder %s13, 3
      %p52 = scmp.ne.s32.totalorder %s47, %s49
      %p53 = scmp.eq.s32.totalorder %s13, 0
      %p54 = por %p52, %p53
      %p55 = scmp.ne.s32.totalorder %s47, %s49
      %p56 = scmp.eq.s32.totalorder %s18, 3
      %p57 = por %p55, %p56
      %p58 = scmp.ne.s32.totalorder %s49, %s50
      %p59 = scmp.eq.s32.totalorder %s18, 0
      %p60 = por %p58, %p59
      %p61 = scmp.ne.s32.totalorder %s49, %s50
      %p62 = scmp.eq.s32.totalorder %s19, 3
      %p63 = por %p61, %p62
      %p65 = scmp.ne.s32.totalorder %s50, %s64
      %p66 = scmp.eq.s32.totalorder %s19, 0
      %p67 = por %p65, %p66
      %s69 = sadd.s32 %s68, 1
      %p72 = scmp.eq.s32.totalorder %s13, 3
      %p73 = scmp.ne.s32.totalorder %s68, %s70
      %p74 = scmp.eq.s32.totalorder %s13, 0
      %p75 = por %p73, %p74
      %p76 = scmp.ne.s32.totalorder %s68, %s70
      %p77 = scmp.eq.s32.totalorder %s18, 3
      %p78 = por %p76, %p77
      %p79 = scmp.ne.s32.totalorder %s70, %s71
      %p80 = scmp.eq.s32.totalorder %s18, 0
      %p81 = por %p79, %p80
      %p82 = scmp.ne.s32.totalorder %s70, %s71
      %p83 = scmp.eq.s32.totalorder %s19, 3
      %p84 = por %p82, %p83
      %p86 = scmp.ne.s32.totalorder %s71, %s85
      %p87 = scmp.eq.s32.totalorder %s19, 0
      %p88 = por %p86, %p87
      %s90 = sadd.s32 %s89, 1
      %p93 = scmp.eq.s32.totalorder %s13, 3
      %p94 = scmp.ne.s32.totalorder %s89, %s91
      %p95 = scmp.eq.s32.totalorder %s13, 0
      %p96 = por %p94, %p95
      %p97 = scmp.ne.s32.totalorder %s89, %s91
      %p98 = scmp.eq.s32.totalorder %s18, 3
      %p99 = por %p97, %p98
      %p100 = scmp.ne.s32.totalorder %s91, %s92
      %p101 = scmp.eq.s32.totalorder %s18, 0
      %p102 = por %p100, %p101
      %p103 = scmp.ne.s32.totalorder %s91, %s92
      %p104 = scmp.eq.s32.totalorder %s19, 3
      %p105 = por %p103, %p104
      %p107 = scmp.ne.s32.totalorder %s92, %s106
      %p108 = scmp.eq.s32.totalorder %s19, 0
      %p109 = por %p107, %p108
      %s110 = ssub.s32 %s13, %s20
      %p111 = scmp.eq.s32.totalorder %s110, 0
      %s113 = sadd.s32 %s112, 1
      %s114 = scalar_select %p111, %s112, %s113
      %p117 = pneg %p111
      %p118 = scmp.eq.s32.totalorder %s13, 3
      %p119 = por %p117, %p118
      %p120 = scmp.ne.s32.totalorder %s112, %s115
      %p121 = scmp.eq.s32.totalorder %s13, 0
      %p122 = por %p120, %p121
      %p123 = scmp.ne.s32.totalorder %s112, %s115
      %p124 = scmp.eq.s32.totalorder %s18, 3
      %p125 = por %p123, %p124
      %p126 = scmp.ne.s32.totalorder %s115, %s116
      %p127 = scmp.eq.s32.totalorder %s18, 0
      %p128 = por %p126, %p127
      %p129 = scmp.ne.s32.totalorder %s115, %s116
      %p130 = scmp.eq.s32.totalorder %s19, 3
      %p131 = por %p129, %p130
      %p133 = scmp.ne.s32.totalorder %s116, %s132
      %p134 = scmp.eq.s32.totalorder %s19, 0
      %p135 = por %p133, %p134
      %p136 = scmp.le.s32.totalorder 1, %s13
      %p137 = scmp.lt.s32.totalorder %s13, 5
      %p138 = pnand %p136, %p137
      %p139 = pneg %p138
      // Predicated region
      $region9: #{tpu_custom_call.1} parent=5 // pred_check
        _
      $region10: #{tpu_custom_call.1} parent=5 // pred_check_branch
        %141 = sbr.rel (%p138) target = $region12
      $region11: #{tpu_custom_call.1} parent=5 // pred_region
        %s142 = ssub.s32 %s13, 1
        // Predicated region
        $region13: #{tpu_custom_call.1} parent=11 // pred_check
          %p143 = pneg %p60
        $region14: #{tpu_custom_call.1} parent=11 // pred_check_branch
          %145 = sbr.rel (%p143) target = $region16
        $region15: #{tpu_custom_call.1} parent=11 // pred_region
          _
        $region16: #{tpu_custom_call.1} parent=11 // pred_fallthru
          _
        // Predicated region
        $region17: #{tpu_custom_call.1} parent=11 // pred_check
          %p146 = pneg %p81
        $region18: #{tpu_custom_call.1} parent=11 // pred_check_branch
          %148 = sbr.rel (%p146) target = $region20
        $region19: #{tpu_custom_call.1} parent=11 // pred_region
          _
        $region20: #{tpu_custom_call.1} parent=11 // pred_fallthru
          _
        // Predicated region
        $region21: #{tpu_custom_call.1} parent=11 // pred_check
          %p149 = pneg %p102
        $region22: #{tpu_custom_call.1} parent=11 // pred_check_branch
          %151 = sbr.rel (%p149) target = $region24
        $region23: #{tpu_custom_call.1} parent=11 // pred_region
          _
        $region24: #{tpu_custom_call.1} parent=11 // pred_fallthru
          _
      $region12: #{tpu_custom_call.1} parent=5 // pred_fallthru
        _
      %p152 = scmp.lt.s32.totalorder %s13, 4
      // Predicated region
      $region25: #{tpu_custom_call.1} parent=5 // pred_check
        %p153 = pneg %p152
      $region26: #{tpu_custom_call.1} parent=5 // pred_check_branch
        %155 = sbr.rel (%p153) target = $region28
      $region27: #{tpu_custom_call.1} parent=5 // pred_region
        // Predicated region
        $region29: #{tpu_custom_call.1} parent=27 // pred_check
          %p156 = pneg %p33
        $region30: #{tpu_custom_call.1} parent=27 // pred_check_branch
          %158 = sbr.rel (%p156) target = $region32
        $region31: #{tpu_custom_call.1} parent=27 // pred_region
          %p159 = scmp.lt.s32.totalorder %s13, 3
          %s160 = scalar_select %p159, %s13, 3
          %s161 = smul.addr %s160, 2
          %s162 = smul.addr %s161, 8
          %s163 = scalar_lea.vmem %s0, %s162
        $region32: #{tpu_custom_call.1} parent=27 // pred_fallthru
          _
      $region28: #{tpu_custom_call.1} parent=5 // pred_fallthru
        _
      %p164 = scmp.le.s32.totalorder 1, %s13
      %p165 = scmp.lt.s32.totalorder %s13, 5
      %p166 = pnand %p164, %p165
      %p167 = pneg %p166
      // Predicated region
      $region33: #{tpu_custom_call.1} parent=5 // pred_check
        _
      $region34: #{tpu_custom_call.1} parent=5 // pred_check_branch
        %169 = sbr.rel (%p166) target = $region36
      $region35: #{tpu_custom_call.1} parent=5 // pred_region
        %s170 = ssub.s32 %s13, 1
        %p171 = scmp.lt.s32.totalorder %s18, 3
        %s172 = scalar_select %p171, %s18, 3
        %s173 = smul.addr %s172, 2
        %s174 = smul.addr %s173, 8
        %s175 = scalar_lea.vmem %s0, %s174
        %p176 = pneg %p39
        %p177 = pneg %p36
        %p178 = pneg %p60
        %p179 = pneg %p57
        %p180 = pneg %p81
        %p181 = pneg %p78
        %p182 = pneg %p102
        %p183 = pneg %p99
        %p184 = pneg %p128
        %p185 = pneg %p125
        %s186 = sand.u32 %s115, 1
        %s187 = scalar_lea.sflag [#allocation3], %s186
        %s188 = sand.u32 %s115, 1
        %s189 = smul.addr %s188, 2
        %s190 = scalar_lea.vmem [#allocation2], %s189
        %p191 = scmp.lt.s32.totalorder %s18, 3
        %s192 = scalar_select %p191, %s18, 3
        %s193 = smul.addr %s192, 2
        %s194 = smul.addr %s193, 8
        %s195 = scalar_lea.vmem %s0, %s194
        %v196 = vld [vmem:[%s195] sm:$0xff]
        %v197 = vld [vmem:[%s195 + $0x8] sm:$0xff]
        %v198 = vld [vmem:[%s1] sm:$0xff]
        %v199 = vld [vmem:[%s1 + $0x8] sm:$0xff]
        %v200 = vld [vmem:[%s1 + $0x10] sm:$0xff]
        %v201 = vld [vmem:[%s1 + $0x18] sm:$0xff]
        %v202 = vld [vmem:[%s1 + $0x20] sm:$0xff]
        %v203 = vld [vmem:[%s1 + $0x28] sm:$0xff]
        %v204 = vld [vmem:[%s1 + $0x30] sm:$0xff]
        %v205 = vld [vmem:[%s1 + $0x38] sm:$0xff]
        %v206 = vld [vmem:[%s1 + $0x40] sm:$0xff]
        %v207 = vld [vmem:[%s1 + $0x48] sm:$0xff]
        %v208 = vld [vmem:[%s1 + $0x50] sm:$0xff]
        %v209 = vld [vmem:[%s1 + $0x58] sm:$0xff]
        %v210 = vld [vmem:[%s1 + $0x60] sm:$0xff]
        %v211 = vld [vmem:[%s1 + $0x68] sm:$0xff]
        %v212 = vld [vmem:[%s2] sm:$0x1]
        %v213 = vld [vmem:[%s2 + $0x1] sm:$0x1]
        %v214 = vld [vmem:[%s2 + $0x2] sm:$0x1]
        %v215 = vperm.slane %v212, 0
        %vm216 = vcmask 130048
        %v218 = vsel %vm216, %v196, 0
        %v221 = vsel %vm216, %v197, 0
        %223 = vmatpush.msra.mxu0 0.0
        %224 = vmatpush.msra.mxu0 0.0
        %225 = vmatpush.msra.mxu0 0.0
        %226 = vmatpush.msra.mxu0 0.0
        %227 = vmatpush.msra.mxu0 0.0
        %228 = vmatpush.msra.mxu0 0.0
        %229 = vmatpush.msra.mxu0 0.0
        %230 = vmatpush.msra.mxu0 0.0
        %231 = vmatpush.msra.mxu0 0.0
        %232 = vmatpush.msra.mxu0 0.0
        %233 = vmatpush.msra.mxu0 0.0
        %234 = vmatpush.msra.mxu0 0.0
        %235 = vmatpush.msra.mxu0 0.0
        %236 = vmatpush.msra.mxu0 0.0
        %237 = vmatpush.msra.mxu0 %v199
        %238 = vmatpush.msra.mxu0 %v198
        %239 = vmatmul.f32.gmra.mxu0 %v218
        %v240 = vpop.f32.mrf.mxu0
        %v241 = vadd.f32 %v215, %v240
        %242 = vmatmul.f32.gmra.mxu0 %v221
        %v243 = vpop.f32.mrf.mxu0
        %v244 = vadd.f32 %v215, %v243
        %245 = vdwg.mxu0
        %vm246 = vcmp.gt.f32.partialorder %v241, 0.0
        %vm247 = vcmp.gt.f32.partialorder %v244, 0.0
        %v248 = vmul.f32 %v241, 1.442695
        %v249 = vpow.pop %v248
        %v250 = vmul.f32 %v244, 1.442695
        %v251 = vpow.pop %v250
        %v252 = vsub.f32 %v249, 1.0
        %v253 = vsub.f32 %v251, 1.0
        %v254 = vsel %vm246, %v241, %v252
        %v255 = vsel %vm247, %v244, %v253
        %v256 = vperm.slane %v213, 0
        %vm257 = vcmask 785408
        %v259 = vsel %vm257, %v254, 0
        %v262 = vsel %vm257, %v255, 0
        %264 = vmatpush.msra.mxu0 0.0
        %265 = vmatpush.msra.mxu0 0.0
        %266 = vmatpush.msra.mxu0 0.0
        %267 = vmatpush.msra.mxu0 0.0
        %268 = vmatpush.msra.mxu0 %v211
        %269 = vmatpush.msra.mxu0 %v210
        %270 = vmatpush.msra.mxu0 %v209
        %271 = vmatpush.msra.mxu0 %v208
        %272 = vmatpush.msra.mxu0 %v207
        %273 = vmatpush.msra.mxu0 %v206
        %274 = vmatpush.msra.mxu0 %v205
        %275 = vmatpush.msra.mxu0 %v204
        %276 = vmatpush.msra.mxu0 %v203
        %277 = vmatpush.msra.mxu0 %v202
        %278 = vmatpush.msra.mxu0 %v201
        %279 = vmatpush.msra.mxu0 %v200
        %280 = vmatmul.f32.gmra.mxu0 %v259
        %v281 = vpop.f32.mrf.mxu0
        %v282 = vadd.f32 %v256, %v281
        %283 = vmatmul.f32.gmra.mxu0 %v262
        %v284 = vpop.f32.mrf.mxu0
        %v285 = vadd.f32 %v256, %v284
        %286 = vdwg.mxu0
        %v287 = vld [vmem:[%s3] sm:$0xff]
        %v288 = vld [vmem:[%s3 + $0x8] sm:$0xff]
        %v289 = vld [vmem:[%s3 + $0x10] sm:$0xff]
        %v290 = vld [vmem:[%s3 + $0x18] sm:$0xff]
        %v291 = vmul.f32 %v282, %v287
        %v292 = vmul.f32 %v282, %v288
        %v293 = vmul.f32 %v282, %v289
        %v294 = vmul.f32 %v282, %v290
        %v295 = vmul.f32 %v285, %v287
        %v296 = vmul.f32 %v285, %v288
        %v297 = vmul.f32 %v285, %v289
        %v298 = vmul.f32 %v285, %v290
        %303 = vrot.lane.b32.xlu0 %v287, 64
        %v304 = vpop.permute.xlu0 %303
        %305 = vrot.lane.b32.xlu0 %v288, 64
        %v306 = vpop.permute.xlu0 %305
        %307 = vrot.lane.b32.xlu0 %v289, 64
        %v308 = vpop.permute.xlu0 %307
        %309 = vrot.lane.b32.xlu0 %v290, 64
        %v310 = vpop.permute.xlu0 %309
        %v315 = vmul.f32 %v282, %v304
        %v316 = vmul.f32 %v282, %v306
        %v317 = vmul.f32 %v282, %v308
        %v318 = vmul.f32 %v282, %v310
        %v319 = vmul.f32 %v285, %v304
        %v320 = vmul.f32 %v285, %v306
        %v321 = vmul.f32 %v285, %v308
        %v322 = vmul.f32 %v285, %v310
        %324 = vrot.lane.b32.xlu0 %v282, 96
        %v325 = vpop.permute.xlu0 %324
        %vm326 = vcmask 261120
        %v327 = vsel %vm326, %v325, 0
        %v330 = vsel %vm326, %v291, 0
        %v333 = vsel %vm326, %v292, 0
        %v336 = vsel %vm326, %v293, 0
        %v339 = vsel %vm326, %v294, 0
        %341 = vmatpush.xpose.msra.mxu0 0.0
        %342 = vmatpush.xpose.msra.mxu0 0.0
        %343 = vmatpush.xpose.msra.mxu0 0.0
        %344 = vmatpush.xpose.msra.mxu0 0.0
        %345 = vmatpush.xpose.msra.mxu0 0.0
        %346 = vmatpush.xpose.msra.mxu0 0.0
        %347 = vmatpush.xpose.msra.mxu0 0.0
        %348 = vmatpush.xpose.msra.mxu0 0.0
        %349 = vmatpush.xpose.msra.mxu0 0.0
        %350 = vmatpush.xpose.msra.mxu0 0.0
        %351 = vmatpush.xpose.msra.mxu0 0.0
        %352 = vmatpush.xpose.msra.mxu0 0.0
        %353 = vmatpush.xpose.msra.mxu0 %v339
        %354 = vmatpush.xpose.msra.mxu0 %v336
        %355 = vmatpush.xpose.msra.mxu0 %v333
        %356 = vmatpush.xpose.msra.mxu0 %v330
        %357 = vmatmul.f32.gmra.mxu0 %v327
        %v358 = vpop.f32.mrf.mxu0
        %v359 = vadd.f32 0.0, %v358
        %360 = vdwg.mxu0
        %362 = vrot.lane.b32.xlu0 %v285, 96
        %v363 = vpop.permute.xlu0 %362
        %v364 = vsel %vm326, %v363, 0
        %v367 = vsel %vm326, %v295, 0
        %v370 = vsel %vm326, %v296, 0
        %v373 = vsel %vm326, %v297, 0
        %v376 = vsel %vm326, %v298, 0
        %378 = vmatpush.xpose.msra.mxu0 0.0
        %379 = vmatpush.xpose.msra.mxu0 0.0
        %380 = vmatpush.xpose.msra.mxu0 0.0
        %381 = vmatpush.xpose.msra.mxu0 0.0
        %382 = vmatpush.xpose.msra.mxu0 0.0
        %383 = vmatpush.xpose.msra.mxu0 0.0
        %384 = vmatpush.xpose.msra.mxu0 0.0
        %385 = vmatpush.xpose.msra.mxu0 0.0
        %386 = vmatpush.xpose.msra.mxu0 0.0
        %387 = vmatpush.xpose.msra.mxu0 0.0
        %388 = vmatpush.xpose.msra.mxu0 0.0
        %389 = vmatpush.xpose.msra.mxu0 0.0
        %390 = vmatpush.xpose.msra.mxu0 %v376
        %391 = vmatpush.xpose.msra.mxu0 %v373
        %392 = vmatpush.xpose.msra.mxu0 %v370
        %393 = vmatpush.xpose.msra.mxu0 %v367
        %394 = vmatmul.f32.gmra.mxu0 %v364
        %v395 = vpop.f32.mrf.mxu0
        %v396 = vadd.f32 0.0, %v395
        %397 = vdwg.mxu0
        %v398 = vsel %vm326, %v359, -inf
        %v399 = vsel %vm326, %v396, -inf
        %v400 = vmax.f32 %v398, %v399
        %v401 = vsub.f32 %v359, %v400
        %v402 = vsub.f32 %v396, %v400
        %v403 = vmul.f32 %v401, 1.442695
        %v404 = vpow.pop %v403
        %v405 = vmul.f32 %v402, 1.442695
        %v406 = vpow.pop %v405
        %v407 = vsel %vm326, %v404, 0.0
        %v408 = vsel %vm326, %v406, 0.0
        %v409 = vadd.f32 %v407, %v408
        %v410 = vrcp.pop %v409
        %v411 = vmul.f32 %v409, %v410
        %v412 = vsub.f32 1.0, %v411
        %v413 = vmul.f32 %v410, %v412
        %v414 = vadd.f32 %v410, %v413
        %vm415 = vweird.f32 %v409
        %vm416 = vweird.f32 %v410
        %vm417 = vmor %vm415, %vm416
        %v418 = vsel %vm417, %v410, %v414
        %v419 = vand.u32 2147483647, %v409
        %vm420 = vcmp.eq.f32.partialorder %v419, 8.507059e+37
        %v421 = vand.u32 %v409, 2147483648
        %v422 = vor.u32 1.1754944e-38, %v421
        %v423 = vsel %vm420, %v422, %v418
        %v424 = vmul.f32 %v404, %v423
        %v425 = vmul.f32 %v406, %v423
        %430 = vrot.lane.b32.xlu0 %v315, 64
        %v431 = vpop.permute.xlu0 %430
        %432 = vrot.lane.b32.xlu0 %v316, 64
        %v433 = vpop.permute.xlu0 %432
        %434 = vrot.lane.b32.xlu0 %v317, 64
        %v435 = vpop.permute.xlu0 %434
        %436 = vrot.lane.b32.xlu0 %v318, 64
        %v437 = vpop.permute.xlu0 %436
        %v443 = vsel %vm326, %v424, 0
        %445 = vmatpush.msra.mxu0 0.0
        %446 = vmatpush.msra.mxu0 0.0
        %447 = vmatpush.msra.mxu0 0.0
        %448 = vmatpush.msra.mxu0 0.0
        %449 = vmatpush.msra.mxu0 0.0
        %450 = vmatpush.msra.mxu0 0.0
        %451 = vmatpush.msra.mxu0 0.0
        %452 = vmatpush.msra.mxu0 0.0
        %453 = vmatpush.msra.mxu0 0.0
        %454 = vmatpush.msra.mxu0 0.0
        %455 = vmatpush.msra.mxu0 0.0
        %456 = vmatpush.msra.mxu0 0.0
        %457 = vmatpush.msra.mxu0 %v437
        %458 = vmatpush.msra.mxu0 %v435
        %459 = vmatpush.msra.mxu0 %v433
        %460 = vmatpush.msra.mxu0 %v431
        %461 = vmatmul.f32.gmra.mxu0 %v443
        %v462 = vpop.f32.mrf.mxu0
        %v463 = vadd.f32 0.0, %v462
        %464 = vdwg.mxu0
        %469 = vrot.lane.b32.xlu0 %v319, 64
        %v470 = vpop.permute.xlu0 %469
        %471 = vrot.lane.b32.xlu0 %v320, 64
        %v472 = vpop.permute.xlu0 %471
        %473 = vrot.lane.b32.xlu0 %v321, 64
        %v474 = vpop.permute.xlu0 %473
        %475 = vrot.lane.b32.xlu0 %v322, 64
        %v476 = vpop.permute.xlu0 %475
        %v482 = vsel %vm326, %v425, 0
        %484 = vmatpush.msra.mxu0 0.0
        %485 = vmatpush.msra.mxu0 0.0
        %486 = vmatpush.msra.mxu0 0.0
        %487 = vmatpush.msra.mxu0 0.0
        %488 = vmatpush.msra.mxu0 0.0
        %489 = vmatpush.msra.mxu0 0.0
        %490 = vmatpush.msra.mxu0 0.0
        %491 = vmatpush.msra.mxu0 0.0
        %492 = vmatpush.msra.mxu0 0.0
        %493 = vmatpush.msra.mxu0 0.0
        %494 = vmatpush.msra.mxu0 0.0
        %495 = vmatpush.msra.mxu0 0.0
        %496 = vmatpush.msra.mxu0 %v476
        %497 = vmatpush.msra.mxu0 %v474
        %498 = vmatpush.msra.mxu0 %v472
        %499 = vmatpush.msra.mxu0 %v470
        %500 = vmatmul.f32.gmra.mxu0 %v482
        %v501 = vpop.f32.mrf.mxu0
        %v502 = vadd.f32 0.0, %v501
        %503 = vdwg.mxu0
        %v504 = vperm.slane %v214, 0
        %v505 = vmul.f32 %v463, %v504
        %v506 = vmul.f32 %v502, %v504
        %v507 = vsel %vm326, %v505, 0.0
        %508 = vadd.xlane.f32.xlu0 %v507
        %v509 = vpop.xlane.xlu0 %508
        %v510 = vsel %vm326, %v506, 0.0
        %511 = vadd.xlane.f32.xlu0 %v510
        %v512 = vpop.xlane.xlu0 %511
        %v515 = vlaneseq
        %v516 = vand.u32 %v515, 127
        %v517 = vperm.slane %v509, %v516
        %v518 = vperm.slane %v512, %v516
        %vm519 = vcmask 1041409
        %v520 = vsel %vm519, %v518, %v517
        %vm522 = vcmask 58368
        %v523 = vsel %vm522, %v520, -inf
        %524 = vmax.xlane.f32.xlu0 %v523
        %v525 = vpop.xlane.xlu0 %524
        %v527 = vperm.slane %v525, 0
        %v528 = vperm.slane %v525, 1
        %v531 = vsub.f32 %v509, %v527
        %v532 = vsub.f32 %v512, %v528
        %v533 = vmul.f32 %v531, 1.442695
        %v534 = vpow.pop %v533
        %v535 = vmul.f32 %v532, 1.442695
        %v536 = vpow.pop %v535
        %539 = vset.pattern.permute.xlu0 0
        %540 = vperm.xlu0 %539, %v534
        %v541 = vpop.permute.xlu0 %540
        %542 = vset.pattern.permute.xlu0 0
        %543 = vperm.xlu0 %542, %v536
        %v544 = vpop.permute.xlu0 %543
        %v545 = vperm.slane %v541, %v516
        %v546 = vperm.slane %v544, %v516
        %v547 = vsel %vm519, %v546, %v545
        %v549 = vsel %vm522, %v547, 0.0
        %550 = vadd.xlane.f32.xlu0 %v549
        %v551 = vpop.xlane.xlu0 %550
        %v553 = vperm.slane %v551, 0
        %v554 = vperm.slane %v551, 1
        %v557 = vrcp.pop %v553
        %v558 = vmul.f32 %v553, %v557
        %v559 = vsub.f32 1.0, %v558
        %v560 = vmul.f32 %v557, %v559
        %v561 = vadd.f32 %v557, %v560
        %vm562 = vweird.f32 %v553
        %vm563 = vweird.f32 %v557
        %vm564 = vmor %vm562, %vm563
        %v565 = vsel %vm564, %v557, %v561
        %v566 = vand.u32 2147483647, %v553
        %vm567 = vcmp.eq.f32.partialorder %v566, 8.507059e+37
        %v568 = vand.u32 %v553, 2147483648
        %v569 = vor.u32 1.1754944e-38, %v568
        %v570 = vsel %vm567, %v569, %v565
        %v571 = vmul.f32 %v534, %v570
        %v572 = vrcp.pop %v554
        %v573 = vmul.f32 %v554, %v572
        %v574 = vsub.f32 1.0, %v573
        %v575 = vmul.f32 %v572, %v574
        %v576 = vadd.f32 %v572, %v575
        %vm577 = vweird.f32 %v554
        %vm578 = vweird.f32 %v572
        %vm579 = vmor %vm577, %vm578
        %v580 = vsel %vm579, %v572, %v576
        %v581 = vand.u32 2147483647, %v554
        %vm582 = vcmp.eq.f32.partialorder %v581, 8.507059e+37
        %v583 = vand.u32 %v554, 2147483648
        %v584 = vor.u32 1.1754944e-38, %v583
        %v585 = vsel %vm582, %v584, %v580
        %v586 = vmul.f32 %v536, %v585
        %589 = vset.pattern.permute.xlu0 0
        %590 = vperm.xlu0 %589, %v571
        %v591 = vpop.permute.xlu0 %590
        %592 = vset.pattern.permute.xlu0 0
        %593 = vperm.xlu0 %592, %v586
        %v594 = vpop.permute.xlu0 %593
        %v595 = vperm.slane %v591, %v516
        %v596 = vperm.slane %v594, %v516
        %v597 = vsel %vm519, %v596, %v595
        %599 = vst.msk [vmem:[%s190] sm:$0x3] %vm522, %v597
        %s600 = sand.u32 %s115, 1
        %s601 = scalar_lea.sflag [#allocation3], %s600
        %s602 = sand.u32 %s115, 1
        %s603 = smul.addr %s602, 2
        %s604 = scalar_lea.vmem [#allocation2], %s603
        // Predicated region
        $region37: #{tpu_custom_call.1} parent=35 // pred_check
          %p605 = pneg %p125
        $region38: #{tpu_custom_call.1} parent=35 // pred_check_branch
          %607 = sbr.rel (%p605) target = $region40
        $region39: #{tpu_custom_call.1} parent=35 // pred_region
          %609 = vsyncadd %s601, 0
          %s610 = smul.addr %s18, 2
          %s611 = scalar_lea.hbm %s4, %s610
          %s613 = sshll.u32 %s604, 4
          %s614 = int_to_ptr.vmem [resolvable:$true] %s613
          %s615 = sshll.u32 %s611, 4
          %s616 = int_to_ptr.hbm [resolvable:$true] %s615
          %618 = dma.vmem_to_hbm [thread:$0]  %s614, 32, %s616, %s601
        $region40: #{tpu_custom_call.1} parent=35 // pred_fallthru
          _
      $region36: #{tpu_custom_call.1} parent=5 // pred_fallthru
        _
      %p619 = scmp.le.s32.totalorder 2, %s13
      // Predicated region
      $region41: #{tpu_custom_call.1} parent=5 // pred_check
        %p620 = pneg %p619
      $region42: #{tpu_custom_call.1} parent=5 // pred_check_branch
        %622 = sbr.rel (%p620) target = $region44
      $region43: #{tpu_custom_call.1} parent=5 // pred_region
        %s623 = ssub.s32 %s13, 2
        // Predicated region
        $region45: #{tpu_custom_call.1} parent=43 // pred_check
          %p624 = pneg %p131
        $region46: #{tpu_custom_call.1} parent=43 // pred_check_branch
          %626 = sbr.rel (%p624) target = $region48
        $region47: #{tpu_custom_call.1} parent=43 // pred_region
          %s627 = sand.u32 %s116, 1
          %s628 = scalar_lea.sflag [#allocation3], %s627
          %s629 = sand.u32 %s116, 1
          %s630 = smul.addr %s629, 2
          %s631 = scalar_lea.vmem [#allocation2], %s630
          %633 = dma.done %s628, 32
        $region48: #{tpu_custom_call.1} parent=43 // pred_fallthru
          _
      $region44: #{tpu_custom_call.1} parent=5 // pred_fallthru
        _
    $region6: #{tpu_custom_call.1} parent=1 // loop_footer
      %s17 = sadd.s32 1, %s13
    $region7: #{tpu_custom_call.1} parent=1 // loop_footer_branch
      %12 = sbr.rel target = $region3
    $region8: #{tpu_custom_call.1} parent=1 // loop_exit
      _
    %634 = vsyncpa [#allocation3], 1
    %s635 = scalar_lea.sflag [#allocation3], 1
    %636 = vsyncpa %s635, 1

</llo_original>
